<compile_context>
chip_gen: v6e
topology: v6e:2x2x1
jax: 0.10.0
libtpu: 0.0.40
codegen_flags: <defaults>
</compile_context>

<pallas_src>
import math

import jax
import jax.numpy as jnp
from jax.experimental import pallas as pl
from jax.experimental.pallas import tpu as pltpu


def _tanh_cat2_kernel(x_ref, o_ref):
    # x_ref: (TR, N); o_ref: (TR, 2N).  One tanh (EUP), two stores of the tile.
    n = x_ref.shape[1]
    t = jnp.tanh(x_ref[...])
    o_ref[:, :n] = t
    o_ref[:, n:] = t


def _tanh_half_kernel(x_ref, o_ref):
    # x_ref / o_ref: (TR, TC).  Called twice per input tile (innermost "half"
    # grid axis); the input block index ignores that axis so it stays resident.
    o_ref[...] = jnp.tanh(x_ref[...])


def _round_up(a, b):
    return ((a + b - 1) // b) * b


def _pick_row_tile(m, row_bytes, sub, budget):
    """Sublane-aligned row tile: <= `budget` input bytes per block, and small
    enough that the row grid has >= 2 (preferably >= 4) steps when possible."""
    tr_budget = max(sub, (budget // max(row_bytes, 1)) // sub * sub)
    if m <= sub:
        return m                      # single full-height block, unavoidable
    min_steps = 4 if m >= 4 * sub else 2
    tr = min(tr_budget, _round_up(-(-m // min_steps), sub))
    return max(tr, sub)


def tanh_cat(x, row_tile=None, col_tile=None):
    """y = tanh(x); return concatenate((y, y), axis=1).  Accepts rank >= 2."""
    assert x.ndim >= 2, "torch.cat(dim=1) requires a rank >= 2 input"
    orig_shape = x.shape
    m = int(orig_shape[0])
    n = int(math.prod(orig_shape[1:]))
    x2 = x.reshape(m, n)
    itemsize = jnp.dtype(x.dtype).itemsize

    sub = 8 * max(1, 4 // itemsize)       # sublane granularity: 8/16/32 rows
    lane = 128
    in_block_budget = 4 * 1024 * 1024     # ~4 MiB input tile -> ~12 MiB traffic/step
    max_col_tile = 2048

    # Column tiling only when full-width blocks would not fit the budget even
    # at the minimum row tile, and lane-dense column blocks dividing N exist.
    use_cols = col_tile is not None
    if not use_cols and n * itemsize * sub > in_block_budget and n % lane == 0:
        col_tile = max(d for d in range(lane, min(n, max_col_tile) + 1, lane)
                       if n % d == 0)
        use_cols = True

    if use_cols:
        # ---- Path B: column-tiled, every store lane-dense --------------------
        tc = int(col_tile)
        assert tc % lane == 0 and n % tc == 0, (
            "col_tile must be a multiple of 128 that divides the flattened width")
        nc = n // tc
        tr = row_tile if row_tile is not None else _pick_row_tile(
            m, tc * itemsize, sub, in_block_budget)
        grid = (pl.cdiv(m, tr), nc, 2)
        out2 = pl.pallas_call(
            _tanh_half_kernel,
            out_shape=jax.ShapeDtypeStruct((m, 2 * n), x.dtype),
            grid_spec=pltpu.PrefetchScalarGridSpec(
                num_scalar_prefetch=0,
                grid=grid,
                # Input block index ignores the half axis -> stays VMEM-resident.
                in_specs=[pl.BlockSpec((tr, tc), lambda i, j, h: (i, j))],
                # Halves land at lane-dense column blocks h*nc + j of (M, 2N).
                out_specs=pl.BlockSpec((tr, tc), lambda i, j, h: (i, h * nc + j)),
            ),
            compiler_params=pltpu.CompilerParams(
                dimension_semantics=("parallel", "parallel", "arbitrary"),
                vmem_limit_bytes=32 * 1024 * 1024,
            ),
        )(x2)
    else:
        # ---- Path A: 1-D row grid, full-width blocks -------------------------
        tr = row_tile if row_tile is not None else _pick_row_tile(
            m, n * itemsize, sub, in_block_budget)
        # Pathological (ultra-wide AND non-128-aligned) widths may need more
        # than 32 MiB of scoped VMEM; grow the limit rather than fail.
        # TODO(synk): tile unaligned ultra-wide widths instead of growing VMEM.
        step_bytes = 2 * (tr * n + tr * 2 * n) * itemsize
        vmem_limit = max(32 * 1024 * 1024,
                         min(step_bytes + (2 << 20), 96 * 1024 * 1024))
        grid = (pl.cdiv(m, tr),)
        out2 = pl.pallas_call(
            _tanh_cat2_kernel,
            out_shape=jax.ShapeDtypeStruct((m, 2 * n), x.dtype),
            grid_spec=pltpu.PrefetchScalarGridSpec(
                num_scalar_prefetch=0,
                grid=grid,
                in_specs=[pl.BlockSpec((tr, n), lambda i: (i, 0))],
                out_specs=pl.BlockSpec((tr, 2 * n), lambda i: (i, 0)),
            ),
            compiler_params=pltpu.CompilerParams(
                dimension_semantics=("parallel",),
                vmem_limit_bytes=vmem_limit,
            ),
        )(x2)

    # (M, 2N) row-major is exactly cat((y, y), dim=1) of the original shape.
    out_shape = (orig_shape[0], 2 * orig_shape[1]) + tuple(orig_shape[2:])
    return out2.reshape(out_shape)


if __name__ == "__main__":
    key = jax.random.PRNGKey(0)
    k1, k2, k3, k4 = jax.random.split(key, 4)

    # Primary: rank-2, lane-aligned width; auto tiling -> multi-step row grid.
    x = jax.random.normal(k1, (64, 128), dtype=jnp.float32)
    out = tanh_cat(x)
    jax.block_until_ready(out)
    ref = jnp.concatenate([jnp.tanh(x), jnp.tanh(x)], axis=1)
    assert out.shape == (64, 256)
    assert jnp.allclose(out, ref, atol=1e-6, rtol=1e-6)

    # Width not a multiple of 128: second half-store is masked but correct.
    x2 = jax.random.normal(k2, (32, 96), dtype=jnp.float32)
    out2 = tanh_cat(x2)
    jax.block_until_ready(out2)
    ref2 = jnp.concatenate([jnp.tanh(x2), jnp.tanh(x2)], axis=1)
    assert out2.shape == (32, 192)
    assert jnp.allclose(out2, ref2, atol=1e-6, rtol=1e-6)

    # Rank-4 input: torch.cat(dim=1) semantics via the flattened (M, 2N) layout.
    x3 = jax.random.normal(k3, (2, 4, 16, 16), dtype=jnp.float32)
    out3 = tanh_cat(x3)
    jax.block_until_ready(out3)
    ref3 = jnp.concatenate([jnp.tanh(x3), jnp.tanh(x3)], axis=1)
    assert out3.shape == (2, 8, 16, 16)
    assert jnp.allclose(out3, ref3, atol=1e-6, rtol=1e-6)

    # Force the column-tiled ("half" grid axis) wide-N path on a small shape.
    x4 = jax.random.normal(k4, (40, 256), dtype=jnp.float32)
    out4 = tanh_cat(x4, row_tile=8, col_tile=128)
    jax.block_until_ready(out4)
    ref4 = jnp.concatenate([jnp.tanh(x4), jnp.tanh(x4)], axis=1)
    assert out4.shape == (40, 512)
    assert jnp.allclose(out4, ref4, atol=1e-6, rtol=1e-6)

    print("KERNEL_OK")
</pallas_src>

<mosaic_0001>
module attributes {stable_mosaic.version = 11 : i64} {
  func.func @_tanh_cat2_kernel(%arg0: i32, %arg1: memref<16x128xf32, #tpu.memory_space<vmem>>, %arg2: memref<16x256xf32, #tpu.memory_space<vmem>>) attributes {dimension_semantics = [#tpu.dimension_semantics<parallel>], iteration_bounds = array<i64: 4>, scalar_prefetch = 0 : i64, scratch_operands = 0 : i64, tpu.core_type = #tpu.core_type<tc>, window_params = [{transform_indices = @transform_0, window_bounds = array<i64: 16, 128>}, {transform_indices = @transform_1, window_bounds = array<i64: 16, 256>}]} {
    %c0 = arith.constant 0 : index
    %c0_0 = arith.constant 0 : index
    %0 = vector.load %arg1[%c0, %c0_0] : memref<16x128xf32, #tpu.memory_space<vmem>>, vector<16x128xf32>
    %1 = math.tanh %0 : vector<16x128xf32>
    %c0_1 = arith.constant 0 : index
    %c0_2 = arith.constant 0 : index
    %2 = vector.load %arg2[%c0_1, %c0_2] : memref<16x256xf32, #tpu.memory_space<vmem>>, vector<16x128xf32>
    tpu.vector_store %arg2[%c0_1, %c0_2], %1 {strides = array<i32>} : memref<16x256xf32, #tpu.memory_space<vmem>>, vector<16x128xf32>,
    %c0_3 = arith.constant 0 : index
    %c128 = arith.constant 128 : index
    %3 = vector.load %arg2[%c0_3, %c128] : memref<16x256xf32, #tpu.memory_space<vmem>>, vector<16x128xf32>
    tpu.vector_store %arg2[%c0_3, %c128], %1 {strides = array<i32>} : memref<16x256xf32, #tpu.memory_space<vmem>>, vector<16x128xf32>,
    return
  }
  func.func @transform_0(%arg0: i32) -> (i32, i32) {
    %c0_i32 = arith.constant 0 : i32
    %c0_i32_0 = arith.constant 0 : i32
    return %arg0, %c0_i32 : i32, i32
  }
  func.func @transform_1(%arg0: i32) -> (i32, i32) {
    %c0_i32 = arith.constant 0 : i32
    %c0_i32_0 = arith.constant 0 : i32
    return %arg0, %c0_i32 : i32, i32
  }
}

</mosaic_0001>

<llo_original>
// kernel: tpu_custom_call.1
$region0: #{tpu_custom_call.1}
  #allocation0 [shape = 'u32[]', space=smem, size = 0x4, offset = 0x4, fixed_abs, tag = 'smem constant byte address 0x4 - core index']
  #allocation1 [shape = 'u32[144,128]{1,0:T(1,128)}', space=vmem, size = 0x12000, scoped, tag = 'internal scratch']
  %s0 = inlined_call_operand.hbm [shape: f32[64,128], index: 0, kind: input, shape index: {}]
  %s1 = inlined_call_operand.hbm [shape: f32[64,256], index: 1, kind: output, shape index: {}]
  %s2 = sld [smem:[#allocation0]]
  $region41: #{tpu_custom_call.1} parent=0
    _
  %s4 = ssub.s32 1, %s2
  %s5 = scalar_select 0, %s4, %s2
  $region1: #{tpu_custom_call.1} parent=0
    #allocation2 [shape = 'u8[16384]{0}', space=vmem, size = 0x4000, scoped, tag = 'input window, operand 0']
    #allocation3 [shape = 's32[2]{0}', space=sflag, size = 0x8, scoped, tag = 'scoped memory for tpu_custom_call.1']
    #allocation4 [shape = 's32[2]{0}', space=sflag, size = 0x8, scoped, tag = 'scoped memory for tpu_custom_call.1']
    #allocation5 [shape = 'u8[32768]{0}', space=vmem, size = 0x8000, scoped, tag = 'output window, operand 0']
    %6 = vsyncpa [#allocation3], 0
    %s7 = scalar_lea.sflag [#allocation3], 1
    %8 = vsyncpa %s7, 0
    %9 = vsyncpa [#allocation4], 0
    %s10 = scalar_lea.sflag [#allocation4], 1
    %11 = vsyncpa %s10, 0
    loop: start=0, step=1, limit=6
    $region2: #{tpu_custom_call.1} parent=1 // loop_pre_header
      _
    $region3: #{tpu_custom_call.1} parent=1 // loop_header
      %s13 = sphi 0, %s17
      %p14 = scmp.ge.s32.totalorder %s13, 6
      %s23 = sphi 0, %s25
      %s26 = sphi 0, %s23
      %s27 = sphi 0, %s26
      %s43 = sphi 0, %s27
      %s49 = sphi 0, %s51
      %s52 = sphi 0, %s49
      %s53 = sphi 0, %s52
      %s69 = sphi 0, %s53
    $region4: #{tpu_custom_call.1} parent=1 // loop_header_branch
      %16 = sbr.rel (%p14) target = $region8
    $region5: #{tpu_custom_call.1} parent=1 // loop_body
      %s18 = ssub.s32 %s13, 1
      %s19 = ssub.s32 %s13, 2
      %s20 = sadd.s32 %s13, 1
      %s21 = ssub.s32 %s13, %s20
      %p22 = scmp.eq.s32.totalorder %s21, 0
      %s24 = sadd.s32 %s23, 1
      %s25 = scalar_select %p22, %s23, %s24
      %p28 = pneg %p22
      %p29 = scmp.eq.s32.totalorder %s13, 3
      %p30 = por %p28, %p29
      %p31 = scmp.ne.s32.totalorder %s23, %s26
      %p32 = scmp.eq.s32.totalorder %s13, 0
      %p33 = por %p31, %p32
      %p34 = scmp.ne.s32.totalorder %s23, %s26
      %p35 = scmp.eq.s32.totalorder %s18, 3
      %p36 = por %p34, %p35
      %p37 = scmp.ne.s32.totalorder %s26, %s27
      %p38 = scmp.eq.s32.totalorder %s18, 0
      %p39 = por %p37, %p38
      %p40 = scmp.ne.s32.totalorder %s26, %s27
      %p41 = scmp.eq.s32.totalorder %s19, 3
      %p42 = por %p40, %p41
      %p44 = scmp.ne.s32.totalorder %s27, %s43
      %p45 = scmp.eq.s32.totalorder %s19, 0
      %p46 = por %p44, %p45
      %s47 = ssub.s32 %s13, %s20
      %p48 = scmp.eq.s32.totalorder %s47, 0
      %s50 = sadd.s32 %s49, 1
      %s51 = scalar_select %p48, %s49, %s50
      %p54 = pneg %p48
      %p55 = scmp.eq.s32.totalorder %s13, 3
      %p56 = por %p54, %p55
      %p57 = scmp.ne.s32.totalorder %s49, %s52
      %p58 = scmp.eq.s32.totalorder %s13, 0
      %p59 = por %p57, %p58
      %p60 = scmp.ne.s32.totalorder %s49, %s52
      %p61 = scmp.eq.s32.totalorder %s18, 3
      %p62 = por %p60, %p61
      %p63 = scmp.ne.s32.totalorder %s52, %s53
      %p64 = scmp.eq.s32.totalorder %s18, 0
      %p65 = por %p63, %p64
      %p66 = scmp.ne.s32.totalorder %s52, %s53
      %p67 = scmp.eq.s32.totalorder %s19, 3
      %p68 = por %p66, %p67
      %p70 = scmp.ne.s32.totalorder %s53, %s69
      %p71 = scmp.eq.s32.totalorder %s19, 0
      %p72 = por %p70, %p71
      %p73 = scmp.le.s32.totalorder 1, %s13
      %p74 = scmp.lt.s32.totalorder %s13, 5
      %p75 = pnand %p73, %p74
      %p76 = pneg %p75
      // Predicated region
      $region9: #{tpu_custom_call.1} parent=5 // pred_check
        _
      $region10: #{tpu_custom_call.1} parent=5 // pred_check_branch
        %78 = sbr.rel (%p75) target = $region12
      $region11: #{tpu_custom_call.1} parent=5 // pred_region
        %s79 = ssub.s32 %s13, 1
      $region12: #{tpu_custom_call.1} parent=5 // pred_fallthru
        _
      %p80 = scmp.lt.s32.totalorder %s13, 4
      // Predicated region
      $region13: #{tpu_custom_call.1} parent=5 // pred_check
        %p81 = pneg %p80
      $region14: #{tpu_custom_call.1} parent=5 // pred_check_branch
        %83 = sbr.rel (%p81) target = $region16
      $region15: #{tpu_custom_call.1} parent=5 // pred_region
        // Predicated region
        $region17: #{tpu_custom_call.1} parent=15 // pred_check
          %p84 = pneg %p33
        $region18: #{tpu_custom_call.1} parent=15 // pred_check_branch
          %86 = sbr.rel (%p84) target = $region20
        $region19: #{tpu_custom_call.1} parent=15 // pred_region
          %s87 = sand.u32 %s23, 1
          %s88 = scalar_lea.sflag [#allocation3], %s87
          %s89 = sand.u32 %s23, 1
          %s90 = smul.addr %s89, 16
          %s91 = scalar_lea.vmem [#allocation2], %s90
          %s92 = smul.u32 2, %s13
          %s94 = ssub.s32 256, 256
          %95 = vsyncadd %s88, %s94
          %s96 = smul.addr %s92, 128
          %s97 = scalar_lea.hbm %s0, %s96
          %s98 = sshll.u32 %s91, 4
          %s99 = int_to_ptr.vmem [resolvable:$true] %s98
          %104 = dma.hbm_to_vmem [thread:$0]  %s97, 256, %s99, %s88, 128, 128, 8
        $region20: #{tpu_custom_call.1} parent=15 // pred_fallthru
          _
      $region16: #{tpu_custom_call.1} parent=5 // pred_fallthru
        _
      %p105 = scmp.le.s32.totalorder 1, %s13
      %p106 = scmp.lt.s32.totalorder %s13, 5
      %p107 = pnand %p105, %p106
      %p108 = pneg %p107
      // Predicated region
      $region21: #{tpu_custom_call.1} parent=5 // pred_check
        _
      $region22: #{tpu_custom_call.1} parent=5 // pred_check_branch
        %110 = sbr.rel (%p107) target = $region24
      $region23: #{tpu_custom_call.1} parent=5 // pred_region
        %s111 = ssub.s32 %s13, 1
        %s112 = sand.u32 %s26, 1
        %s113 = scalar_lea.sflag [#allocation3], %s112
        %s114 = sand.u32 %s26, 1
        %s115 = smul.addr %s114, 16
        %s116 = scalar_lea.vmem [#allocation2], %s115
        // Predicated region
        $region25: #{tpu_custom_call.1} parent=23 // pred_check
          %p117 = pneg %p39
        $region26: #{tpu_custom_call.1} parent=23 // pred_check_branch
          %119 = sbr.rel (%p117) target = $region28
        $region27: #{tpu_custom_call.1} parent=23 // pred_region
          %120 = dma.done %s113, 256
        $region28: #{tpu_custom_call.1} parent=23 // pred_fallthru
          _
        %s121 = sand.u32 %s26, 1
        %s122 = scalar_lea.sflag [#allocation3], %s121
        %s123 = sand.u32 %s26, 1
        %s124 = smul.addr %s123, 16
        %s125 = scalar_lea.vmem [#allocation2], %s124
        %p126 = pneg %p39
        %p127 = pneg %p36
        %p128 = pneg %p65
        %p129 = pneg %p62
        %s130 = sand.u32 %s52, 1
        %s131 = scalar_lea.sflag [#allocation4], %s130
        %s132 = sand.u32 %s52, 1
        %s133 = smul.addr %s132, 32
        %s134 = scalar_lea.vmem [#allocation5], %s133
        %s135 = smul.u32 2, %s18
        %s136 = smul.u32 2, %s18
        %v137 = vld [vmem:[%s116] sm:$0xff]
        %v138 = vld [vmem:[%s116 + $0x8] sm:$0xff]
        %v139 = vtanh.pop %v137
        %v140 = vtanh.pop %v138
        %141 = vst [vmem:[%s134] sm:$0xff] %v139
        %142 = vst [vmem:[%s134 + $0x10] sm:$0xff] %v140
        %143 = vst [vmem:[%s134 + $0x8] sm:$0xff] %v139
        %144 = vst [vmem:[%s134 + $0x18] sm:$0xff] %v140
        %s145 = sand.u32 %s52, 1
        %s146 = scalar_lea.sflag [#allocation4], %s145
        %s147 = sand.u32 %s52, 1
        %s148 = smul.addr %s147, 32
        %s149 = scalar_lea.vmem [#allocation5], %s148
        // Predicated region
        $region29: #{tpu_custom_call.1} parent=23 // pred_check
          %p150 = pneg %p62
        $region30: #{tpu_custom_call.1} parent=23 // pred_check_branch
          %152 = sbr.rel (%p150) target = $region32
        $region31: #{tpu_custom_call.1} parent=23 // pred_region
          %s153 = smul.u32 2, %s18
          %s155 = ssub.s32 512, 512
          %156 = vsyncadd %s146, %s155
          %s157 = smul.addr %s153, 2
          %s158 = smul.addr %s157, 128
          %s159 = scalar_lea.hbm %s1, %s158
          %s160 = sshll.u32 %s149, 4
          %s161 = int_to_ptr.vmem [resolvable:$true] %s160
          %166 = dma.vmem_to_hbm [thread:$0]  %s161, 512, %s159, %s146, 256, 256, 16
        $region32: #{tpu_custom_call.1} parent=23 // pred_fallthru
          _
      $region24: #{tpu_custom_call.1} parent=5 // pred_fallthru
        _
      %p167 = scmp.le.s32.totalorder 2, %s13
      // Predicated region
      $region33: #{tpu_custom_call.1} parent=5 // pred_check
        %p168 = pneg %p167
      $region34: #{tpu_custom_call.1} parent=5 // pred_check_branch
        %170 = sbr.rel (%p168) target = $region36
      $region35: #{tpu_custom_call.1} parent=5 // pred_region
        %s171 = ssub.s32 %s13, 2
        // Predicated region
        $region37: #{tpu_custom_call.1} parent=35 // pred_check
          %p172 = pneg %p68
        $region38: #{tpu_custom_call.1} parent=35 // pred_check_branch
          %174 = sbr.rel (%p172) target = $region40
        $region39: #{tpu_custom_call.1} parent=35 // pred_region
          %s175 = sand.u32 %s53, 1
          %s176 = scalar_lea.sflag [#allocation4], %s175
          %s177 = sand.u32 %s53, 1
          %s178 = smul.addr %s177, 32
          %s179 = scalar_lea.vmem [#allocation5], %s178
          %180 = dma.done %s176, 512
        $region40: #{tpu_custom_call.1} parent=35 // pred_fallthru
          _
      $region36: #{tpu_custom_call.1} parent=5 // pred_fallthru
        _
    $region6: #{tpu_custom_call.1} parent=1 // loop_footer
      %s17 = sadd.s32 1, %s13
    $region7: #{tpu_custom_call.1} parent=1 // loop_footer_branch
      %12 = sbr.rel target = $region3
    $region8: #{tpu_custom_call.1} parent=1 // loop_exit
      _
    %181 = vsyncpa [#allocation3], 1
    %s182 = scalar_lea.sflag [#allocation3], 1
    %183 = vsyncpa %s182, 1
    %184 = vsyncpa [#allocation4], 1
    %s185 = scalar_lea.sflag [#allocation4], 1
    %186 = vsyncpa %s185, 1

</llo_original>
